<compile_context>
chip_gen: v6e
topology: v6e:2x2x1
jax: 0.10.0
libtpu: 0.0.40
codegen_flags: <defaults>
</compile_context>

<pallas_src>
import jax
import jax.numpy as jnp
from jax import lax
from jax.experimental import pallas as pl
from jax.experimental.pallas import tpu as pltpu


def _matmul_kernel(x_ref, w_ref, o_ref):
    # x_ref: (tile_m, K*C_in) compute_dtype
    # w_ref: (K*C_in, C_out) compute_dtype -- constant index_map, DMA'd once
    # o_ref: (tile_m, C_out) out_dtype -- unpadded along C_out
    o_ref[...] = jnp.dot(
        x_ref[...], w_ref[...], preferred_element_type=jnp.float32
    ).astype(o_ref.dtype)


def _round_up(x, m):
    return (x + m - 1) // m * m


def conv_interp_forward(x, weight, *, stride=3, padding=1,
                        compute_dtype=jnp.bfloat16, tile_m=None):
    """ConvInterp.forward.

    x: (B, L, C_in); weight: (C_out, C_in, K) (PyTorch Conv1d layout).
    Returns (B, L_out, C_out) in x.dtype (matmul runs in `compute_dtype`
    with f32 accumulation).
    """
    B, L, C_in = x.shape
    C_out, C_in_w, K = weight.shape
    assert C_in_w == C_in
    L_out = (L + 2 * padding - K) // stride + 1

    M = B * L_out
    KC = K * C_in
    out_dtype = x.dtype
    c_bytes = jnp.dtype(compute_dtype).itemsize
    o_bytes = jnp.dtype(out_dtype).itemsize

    # ---- tile_m: big enough to amortize per-step overhead, VMEM-safe -------
    if tile_m is None:
        row_hbm = KC * c_bytes + C_out * o_bytes               # real HBM bytes / row
        row_vmem = (_round_up(KC, 128) * c_bytes
                    + _round_up(C_out, 128) * o_bytes)         # lane-padded VMEM / row
        tile_m = max(512, (1 << 20) // row_hbm)                # ~1 MiB real traffic / step
        tile_m = min(tile_m, (12 << 20) // (2 * row_vmem))     # ~12 MiB double-buffered cap
    tile_m = _round_up(max(int(tile_m), 8), 8)
    tile_m = min(tile_m, _round_up(M, 8))
    # Prefer >= 2 grid steps when M is non-trivial so the "parallel" axis can
    # shard across v7x's two TensorCores (near-free on 1-TC parts).
    if M > 16 and 2 * tile_m > M:
        tile_m = _round_up(-(-M // 2), 8)
    M_pad = _round_up(M, tile_m)
    n_m = M_pad // tile_m

    # ---- prologue: cast first, single L pad, im2col as a reshape -----------
    x_c = x.astype(compute_dtype)
    if stride == K:
        need = L_out * K                       # padded timesteps actually consumed
        pad_hi = need - (L + padding)
        if pad_hi >= 0:
            x_win = jnp.pad(x_c, ((0, 0), (padding, pad_hi), (0, 0)))
        else:
            x_win = jnp.pad(x_c, ((0, 0), (padding, 0), (0, 0)))[:, :need, :]
        x2d = x_win.reshape(M, KC)
    else:
        # TODO(synk): general stride != kernel_size falls back to an XLA
        # gather-based im2col (not needed for this module's defaults).
        x_p = jnp.pad(x_c, ((0, 0), (padding, padding), (0, 0)))
        idx = jnp.arange(L_out)[:, None] * stride + jnp.arange(K)[None, :]
        x2d = x_p[:, idx, :].reshape(M, KC)
    if M_pad > M:
        x2d = jnp.pad(x2d, ((0, M_pad - M), (0, 0)))

    # w2d[k*C_in + ci, co] = weight[co, ci, k]
    w2d = jnp.transpose(weight, (2, 1, 0)).reshape(KC, C_out).astype(compute_dtype)

    cost = pl.CostEstimate(
        flops=2 * M * KC * C_out,
        transcendentals=0,
        bytes_accessed=(M * KC * c_bytes
                        + KC * C_out * c_bytes
                        + M * C_out * o_bytes),
    )

    out = pl.pallas_call(
        _matmul_kernel,
        out_shape=jax.ShapeDtypeStruct((M_pad, C_out), out_dtype),
        grid_spec=pltpu.PrefetchScalarGridSpec(
            num_scalar_prefetch=0,
            grid=(n_m,),
            in_specs=[
                pl.BlockSpec((tile_m, KC), lambda i: (i, 0)),
                # constant index_map -> weight DMA'd once, stays resident.
                pl.BlockSpec((KC, C_out), lambda i: (0, 0)),
            ],
            # Last block dim == full array dim: no C_out padding, no extra
            # post-kernel N slice; lane-dense stores when C_out % 128 == 0.
            out_specs=pl.BlockSpec((tile_m, C_out), lambda i: (i, 0)),
        ),
        compiler_params=pltpu.CompilerParams(
            dimension_semantics=("parallel",),
            # Let XLA fuse the cast/pad/reshape prologue into the x input DMA
            # instead of materializing x2d in HBM (x only; weight untouched).
            allow_input_fusion=[True, False],
        ),
        cost_estimate=cost,
    )(x2d, w2d)

    if M_pad > M:
        out = out[:M]
    return out.reshape(B, L_out, C_out)


if __name__ == "__main__":
    # Small shapes consistent with the module's forward: x is (B, L, C_in).
    B, L, C_in, C_out = 2, 16, 4, 8
    K, STRIDE, PAD = 3, 3, 1

    key = jax.random.PRNGKey(0)
    kx, kw = jax.random.split(key)
    x = jax.random.normal(kx, (B, L, C_in), dtype=jnp.float32)
    # Deterministic synthetic Conv1d weight, PyTorch layout (C_out, C_in, K).
    weight = jax.random.normal(kw, (C_out, C_in, K), dtype=jnp.float32) * 0.1

    out = conv_interp_forward(x, weight, stride=STRIDE, padding=PAD)
    out = jax.block_until_ready(out)

    # Reference 1: XLA conv with the same bf16 inputs / f32 accumulation
    # (tight tolerance check of the kernel's math).
    ref_bf16 = lax.conv_general_dilated(
        jnp.transpose(x, (0, 2, 1)).astype(jnp.bfloat16),   # NCL
        weight.astype(jnp.bfloat16),                         # OIK
        window_strides=(STRIDE,),
        padding=[(PAD, PAD)],
        dimension_numbers=("NCH", "OIH", "NCH"),
        preferred_element_type=jnp.float32,
    )
    ref_bf16 = jnp.transpose(ref_bf16, (0, 2, 1))

    # Reference 2: full-f32 conv, mimicking nn.Conv1d exactly (semantic check,
    # loose tolerance due to the bf16 cast on the MXU path).
    ref_f32 = lax.conv_general_dilated(
        jnp.transpose(x, (0, 2, 1)),
        weight,
        window_strides=(STRIDE,),
        padding=[(PAD, PAD)],
        dimension_numbers=("NCH", "OIH", "NCH"),
    )
    ref_f32 = jnp.transpose(ref_f32, (0, 2, 1))

    assert out.shape == ref_f32.shape, (out.shape, ref_f32.shape)
    assert jnp.allclose(out, ref_bf16, atol=1e-4, rtol=1e-4), (
        float(jnp.max(jnp.abs(out - ref_bf16)))
    )
    assert jnp.allclose(out, ref_f32, atol=6e-2, rtol=6e-2), (
        float(jnp.max(jnp.abs(out - ref_f32)))
    )
    print("KERNEL_OK")
</pallas_src>

<mosaic_0001>
module attributes {stable_mosaic.version = 11 : i64} {
  func.func @_matmul_kernel(%arg0: i32, %arg1: memref<16x12xbf16, #tpu.memory_space<vmem>>, %arg2: memref<12x8xbf16, #tpu.memory_space<vmem>>, %arg3: memref<16x8xf32, #tpu.memory_space<vmem>>) attributes {dimension_semantics = [#tpu.dimension_semantics<parallel>], iteration_bounds = array<i64: 1>, scalar_prefetch = 0 : i64, scratch_operands = 0 : i64, tpu.core_type = #tpu.core_type<tc>, window_params = [{transform_indices = @transform_0, window_bounds = array<i64: 16, 12>}, {pipeline_mode = #tpu.pipeline_mode<synchronous>, transform_indices = @transform_1, window_bounds = array<i64: 12, 8>}, {transform_indices = @transform_2, window_bounds = array<i64: 16, 8>}]} {
    %c0 = arith.constant 0 : index
    %c0_0 = arith.constant 0 : index
    %0 = vector.load %arg1[%c0, %c0_0] : memref<16x12xbf16, #tpu.memory_space<vmem>>, vector<16x12xbf16>
    %c0_1 = arith.constant 0 : index
    %c0_2 = arith.constant 0 : index
    %1 = vector.load %arg2[%c0_1, %c0_2] : memref<12x8xbf16, #tpu.memory_space<vmem>>, vector<12x8xbf16>
    %cst = arith.constant dense<0.000000e+00> : vector<16x8xf32>
    %2 = tpu.matmul %0, %1, %cst {dimension_numbers = #tpu.dot_dimension_numbers<[1], [0], [0], [1], [0, 0, 1, 1], [], []>} : vector<16x12xbf16>, vector<12x8xbf16>, vector<16x8xf32> -> vector<16x8xf32>
    %c0_3 = arith.constant 0 : index
    %c0_4 = arith.constant 0 : index
    %3 = vector.load %arg3[%c0_3, %c0_4] : memref<16x8xf32, #tpu.memory_space<vmem>>, vector<16x8xf32>
    tpu.vector_store %arg3[%c0_3, %c0_4], %2 {strides = array<i32>} : memref<16x8xf32, #tpu.memory_space<vmem>>, vector<16x8xf32>,
    return
  }
  func.func @transform_0(%arg0: i32) -> (i32, i32) {
    %c0_i32 = arith.constant 0 : i32
    %c0_i32_0 = arith.constant 0 : i32
    return %arg0, %c0_i32 : i32, i32
  }
  func.func @transform_1(%arg0: i32) -> (i32, i32) {
    %c0_i32 = arith.constant 0 : i32
    %c0_i32_0 = arith.constant 0 : i32
    %c0_i32_1 = arith.constant 0 : i32
    return %c0_i32, %c0_i32_0 : i32, i32
  }
  func.func @transform_2(%arg0: i32) -> (i32, i32) {
    %c0_i32 = arith.constant 0 : i32
    %c0_i32_0 = arith.constant 0 : i32
    return %arg0, %c0_i32 : i32, i32
  }
}

</mosaic_0001>

<llo_original>
// kernel: tpu_custom_call.1
$region0: #{tpu_custom_call.1}
  #allocation0 [shape = 'u32[]', space=smem, size = 0x4, offset = 0x4, fixed_abs, tag = 'smem constant byte address 0x4 - core index']
  #allocation1 [shape = 'u32[144,128]{1,0:T(1,128)}', space=vmem, size = 0x12000, scoped, tag = 'internal scratch']
  %s0 = inlined_call_operand.vmem [shape: bf16[16,12], index: 0, kind: input, shape index: {}]
  %s1 = inlined_call_operand.vmem [shape: bf16[12,8], index: 1, kind: input, shape index: {}]
  %s2 = inlined_call_operand.vmem [shape: f32[16,8], index: 2, kind: output, shape index: {}]
  %s3 = sld [smem:[#allocation0]]
  $region18: #{tpu_custom_call.1} parent=0
    _
  %s5 = ssub.s32 1, %s3
  %s6 = scalar_select 0, %s5, %s3
  // Predicated region
  $region2: #{tpu_custom_call.1} parent=0 // pred_check
    _
  $region3: #{tpu_custom_call.1} parent=0 // pred_check_branch
    %8 = sbr.rel (0) target = $region5
  $region4: #{tpu_custom_call.1} parent=0 // pred_region
    _
  $region5: #{tpu_custom_call.1} parent=0 // pred_fallthru
    _
  // Predicated region
  $region6: #{tpu_custom_call.1} parent=0 // pred_check
    _
  $region7: #{tpu_custom_call.1} parent=0 // pred_check_branch
    %10 = sbr.rel (0) target = $region9
  $region8: #{tpu_custom_call.1} parent=0 // pred_region
    _
  $region9: #{tpu_custom_call.1} parent=0 // pred_fallthru
    _
  %v12 = vld [vmem:[%s0] sm:$0xf]
  %v13 = vld [vmem:[%s0 + $0x4] sm:$0xf]
  %v14 = vld [vmem:[%s1] sm:$0xf]
  %v15 = vld [vmem:[%s1 + $0x4] sm:$0x3]
  %v18 = vunpack.c.l.b16 %v12
  %v19 = vunpack.c.l.b16 %v13
  %v20 = vpack.c.b16 %v19, %v18
  %v23 = vunpack.c.l.b16 %v14
  %v24 = vunpack.c.l.b16 %v15
  %v25 = vpack.c.b16 %v24, %v23
  %vm26 = vcmask 97280
  %v28 = vsel %vm26, %v20, 0
  %vm30 = vcmask 1045504
  %v32 = vsel %vm30, %v25, 0
  %34 = vmatprep.subr.bf16.mxu0 0
  %35 = vmatpush1.bf16.msra.mxu0 0
  %36 = vmatprep.subr.bf16.mxu0 0
  %37 = vmatpush1.bf16.msra.mxu0 0
  %38 = vmatprep.subr.bf16.mxu0 0
  %39 = vmatpush1.bf16.msra.mxu0 0
  %40 = vmatprep.subr.bf16.mxu0 0
  %41 = vmatpush1.bf16.msra.mxu0 0
  %42 = vmatprep.subr.bf16.mxu0 0
  %43 = vmatpush1.bf16.msra.mxu0 0
  %44 = vmatprep.subr.bf16.mxu0 0
  %45 = vmatpush1.bf16.msra.mxu0 0
  %46 = vmatprep.subr.bf16.mxu0 0
  %47 = vmatpush1.bf16.msra.mxu0 0
  %48 = vmatprep.subr.bf16.mxu0 0
  %49 = vmatpush1.bf16.msra.mxu0 %v32
  %50 = vmatprep.subr.bf16.mxu0 0
  %51 = vmatpush2.bf16.msra.mxu0 0
  %52 = vmatprep.subr.bf16.mxu0 0
  %53 = vmatpush2.bf16.msra.mxu0 0
  %54 = vmatprep.subr.bf16.mxu0 0
  %55 = vmatpush2.bf16.msra.mxu0 0
  %56 = vmatprep.subr.bf16.mxu0 0
  %57 = vmatpush2.bf16.msra.mxu0 0
  %58 = vmatprep.subr.bf16.mxu0 0
  %59 = vmatpush2.bf16.msra.mxu0 0
  %60 = vmatprep.subr.bf16.mxu0 0
  %61 = vmatpush2.bf16.msra.mxu0 0
  %62 = vmatprep.subr.bf16.mxu0 0
  %63 = vmatpush2.bf16.msra.mxu0 0
  %64 = vmatprep.subr.bf16.mxu0 0
  %65 = vmatpush2.bf16.msra.mxu0 0
  %66 = vmatprep.mubr.bf16.mxu0 0
  %67 = vmatmul.mubr.bf16.gmra.mxu0 %v28
  %v68 = vpop.f32.mrf.mxu0
  %v69 = vadd.f32 0.0, %v68
  %v70 = vpop.f32.mrf.mxu0
  %v71 = vpop.f32.mrf.mxu0
  %v72 = vadd.f32 0.0, %v71
  %v73 = vpop.f32.mrf.mxu0
  %74 = vdwg.mxu0
  %vm75 = vcmask 64512
  %76 = vst.msk [vmem:[%s2] sm:$0xff] %vm75, %v69
  %77 = vst.msk [vmem:[%s2 + $0x8] sm:$0xff] %vm75, %v72
  // Predicated region
  $region10: #{tpu_custom_call.1} parent=0 // pred_check
    _
  $region11: #{tpu_custom_call.1} parent=0 // pred_check_branch
    %79 = sbr.rel (0) target = $region13
  $region12: #{tpu_custom_call.1} parent=0 // pred_region
    _
  $region13: #{tpu_custom_call.1} parent=0 // pred_fallthru
    _
  // Predicated region
  $region14: #{tpu_custom_call.1} parent=0 // pred_check
    _
  $region15: #{tpu_custom_call.1} parent=0 // pred_check_branch
    %81 = sbr.rel (0) target = $region17
  $region16: #{tpu_custom_call.1} parent=0 // pred_region
    _
  $region17: #{tpu_custom_call.1} parent=0 // pred_fallthru
    _

</llo_original>
